<compile_context>
chip_gen: v7x
topology: tpu7x:2x2x1
jax: 0.10.0
libtpu: 0.0.40
codegen_flags: <defaults>
</compile_context>

<pallas_src>
import jax
import jax.numpy as jnp
from jax import lax
from jax.experimental import pallas as pl
from jax.experimental.pallas import tpu as pltpu

_MiB = 1024 * 1024


def _round_up(x, m):
    return (x + m - 1) // m * m


def _vmem_capacity_bytes():
    # Per-TensorCore physical VMEM (v5e/v6e: 128 MiB, v7x: 64 MiB).
    try:
        return int(pltpu.get_tpu_info().vmem_capacity_bytes)
    except Exception:
        return 64 * _MiB  # conservative fallback (v7x size)


def _sublanes(dtype):
    # Rows per vreg: 8 for 32-bit, 16 for 16-bit, 32 for 8-bit dtypes.
    return max(8, 32 // jnp.dtype(dtype).itemsize)


# ---------------------------------------------------------------------------
# Kernels
# ---------------------------------------------------------------------------
def _linear_kernel_acc(x_ref, w_ref, b_ref, o_ref, acc_ref):
    # x_ref:  (tile_b, tile_k)   input tile
    # w_ref:  (tile_n, tile_k)   weight tile in PyTorch (C, H) orientation
    # b_ref:  (1, tile_n)        bias row tile
    # o_ref:  (tile_b, tile_n)   output tile (written on last K step)
    # acc_ref:(tile_b, tile_n)   f32 accumulator, lives across K steps
    k = pl.program_id(2)

    @pl.when(k == 0)
    def _init():
        acc_ref[...] = jnp.zeros_like(acc_ref)

    # Contract last dims of both operands: x @ W^T, no W transpose in HBM.
    acc_ref[...] += lax.dot_general(
        x_ref[...], w_ref[...],
        dimension_numbers=(((1,), (1,)), ((), ())),
        preferred_element_type=jnp.float32)

    @pl.when(k == pl.num_programs(2) - 1)
    def _finalize():
        o_ref[...] = (acc_ref[...] + b_ref[...]).astype(o_ref.dtype)


def _linear_kernel_direct(x_ref, w_ref, b_ref, o_ref):
    # Single-K-tile fast path: no accumulator scratch, one store per tile.
    acc = lax.dot_general(
        x_ref[...], w_ref[...],
        dimension_numbers=(((1,), (1,)), ((), ())),
        preferred_element_type=jnp.float32)
    o_ref[...] = (acc + b_ref[...]).astype(o_ref.dtype)


# ---------------------------------------------------------------------------
# One-time parameter preparation (hoisted out of the per-call path)
# ---------------------------------------------------------------------------
def prepare_classifier(weight, bias, *, weight_dtype=None):
    """Pad/cast the Linear parameters once and pick generation-aware tiles.

    weight: (C, H) PyTorch nn.Linear layout.  bias: (C,).
    weight_dtype: optional narrower streaming dtype (e.g. jnp.bfloat16).
    """
    C, H = weight.shape
    assert bias.shape == (C,)
    if weight_dtype is not None:
        weight = weight.astype(weight_dtype)  # cast once, cached

    vmem = _vmem_capacity_bytes()
    if vmem >= 100 * _MiB:          # v5e / v6e (128 MiB VMEM): big tiles
        tile_n_max, tile_k_max = 2048, 4096
    else:                            # v7x (64 MiB VMEM)
        tile_n_max, tile_k_max = 1024, 2048

    # N (classes): multiple of 128 -> lane-dense (unmasked) output stores.
    if C <= tile_n_max:
        tile_n = _round_up(C, 128)
        Cp = tile_n
    else:
        tile_n = tile_n_max
        Cp = _round_up(C, tile_n)

    # K (hidden): resident when small, otherwise long 512-multiple K tiles.
    if H <= tile_k_max:
        tile_k = H
        Hp = H
    else:
        tile_k = tile_k_max
        Hp = _round_up(H, tile_k)

    wp = weight if (Cp == C and Hp == H) else jnp.pad(
        weight, ((0, Cp - C), (0, Hp - H)))
    bp = (bias if Cp == C else jnp.pad(bias, (0, Cp - C))).reshape(1, Cp)
    wp = jax.block_until_ready(wp)
    bp = jax.block_until_ready(bp)

    return {
        "weight": wp, "bias": bp,
        "C": C, "H": H, "Cp": Cp, "Hp": Hp,
        "tile_n": tile_n, "tile_k": tile_k,
        "vmem_capacity": vmem,
    }


# ---------------------------------------------------------------------------
# Per-call forward
# ---------------------------------------------------------------------------
def classifier_forward(x, prep, *, tile_b_max=1024):
    """x: (B, H).  prep: output of prepare_classifier."""
    B, H = x.shape
    assert H == prep["H"]
    wp, bp = prep["weight"], prep["bias"]
    C, Cp, Hp = prep["C"], prep["Cp"], prep["Hp"]
    tile_n, tile_k = prep["tile_n"], prep["tile_k"]
    vmem = prep["vmem_capacity"]

    x_item = x.dtype.itemsize
    w_item = wp.dtype.itemsize
    b_item = bp.dtype.itemsize
    o_item = x.dtype.itemsize
    sub = _sublanes(x.dtype)

    grid_n = Cp // tile_n
    grid_k = Hp // tile_k

    # Operands whose block index never changes need only a single buffer.
    w_const = (grid_n == 1 and grid_k == 1)
    b_const = (grid_n == 1)
    w_bufs = 1 if w_const else 2
    b_bufs = 1 if b_const else 2

    # ---- dtype-aware VMEM budget (per-TC, generation-aware) ---------------
    headroom = 8 * _MiB
    fixed = w_bufs * tile_n * tile_k * w_item + b_bufs * tile_n * b_item
    budget = max(2 * _MiB, vmem - headroom - fixed)
    # bytes per batch-tile row: x (dbl-buf) + out (dbl-buf) + f32 acc
    per_row = (2 * tile_k * x_item
               + 2 * tile_n * o_item
               + (tile_n * 4 if grid_k > 1 else 0))
    tile_b_fit = max(sub, (budget // per_row) // sub * sub)

    # M (batch): keep grid_m == 1 whenever possible (total W traffic scales
    # with grid_m).  v7x megacore sharding comes from grid_n, for free.
    tile_b = int(min(_round_up(B, sub), tile_b_max, tile_b_fit))
    Bp = _round_up(B, tile_b)
    grid_m = Bp // tile_b

    xp = x if (Bp == B and Hp == H) else jnp.pad(x, ((0, Bp - B), (0, Hp - H)))

    vmem_used = fixed + tile_b * per_row
    vmem_limit = int(min(vmem - 4 * _MiB, max(8 * _MiB, vmem_used + 4 * _MiB)))

    # Cost estimate reflecting the real streamed bytes (re-read factors).
    cost = pl.CostEstimate(
        flops=2 * Bp * Hp * Cp,
        transcendentals=0,
        bytes_accessed=(grid_n * Bp * Hp * x_item      # x streamed grid_n times
                        + grid_m * Cp * Hp * w_item    # W streamed grid_m times
                        + grid_m * Cp * b_item
                        + Bp * Cp * o_item),
    )

    def spec(shape, idx, n_bufs):
        if n_bufs == 1:
            return pl.BlockSpec(shape, idx, pipeline_mode=pl.Buffered(1))
        return pl.BlockSpec(shape, idx)

    if grid_k > 1:
        grid = (grid_m, grid_n, grid_k)
        in_specs = [
            pl.BlockSpec((tile_b, tile_k), lambda i, j, k: (i, k)),      # x
            spec((tile_n, tile_k), lambda i, j, k: (j, k), w_bufs),      # W (C,H)
            spec((1, tile_n), lambda i, j, k: (0, j), b_bufs),           # bias
        ]
        out_specs = pl.BlockSpec((tile_b, tile_n), lambda i, j, k: (i, j))
        kernel = _linear_kernel_acc
        scratch = [pltpu.VMEM((tile_b, tile_n), jnp.float32)]
        dims = ("parallel", "parallel", "arbitrary")
    else:
        # K fits in one tile: no accumulator, no K grid axis.
        grid = (grid_m, grid_n)
        in_specs = [
            pl.BlockSpec((tile_b, tile_k), lambda i, j: (i, 0)),          # x
            spec((tile_n, tile_k), lambda i, j: (j, 0), w_bufs),          # W (C,H)
            spec((1, tile_n), lambda i, j: (0, j), b_bufs),               # bias
        ]
        out_specs = pl.BlockSpec((tile_b, tile_n), lambda i, j: (i, j))
        kernel = _linear_kernel_direct
        scratch = []
        dims = ("parallel", "parallel")

    out_padded = pl.pallas_call(
        kernel,
        out_shape=jax.ShapeDtypeStruct((Bp, Cp), x.dtype),
        grid_spec=pltpu.PrefetchScalarGridSpec(
            num_scalar_prefetch=0,
            grid=grid,
            in_specs=in_specs,
            out_specs=out_specs,
            scratch_shapes=scratch,
        ),
        compiler_params=pltpu.CompilerParams(
            dimension_semantics=dims,
            vmem_limit_bytes=vmem_limit,
        ),
        cost_estimate=cost,
    )(xp, wp, bp)

    # Slice the zero-padded rows/columns back off outside the kernel.
    return out_padded[:B, :C]


if __name__ == "__main__":
    # Small shapes consistent with the module: batch=8, hidden_dim=32, num_classes=16
    B, HIDDEN, NUM_CLASSES = 8, 32, 16

    key = jax.random.PRNGKey(0)
    kx, kw, kb = jax.random.split(key, 3)

    x = jax.random.normal(kx, (B, HIDDEN), dtype=jnp.float32)
    # PyTorch Linear parameter shapes: W (C, H), b (C,)
    bound = 1.0 / (HIDDEN ** 0.5)
    weight = jax.random.uniform(kw, (NUM_CLASSES, HIDDEN), jnp.float32, -bound, bound)
    bias = jax.random.uniform(kb, (NUM_CLASSES,), jnp.float32, -bound, bound)

    # One-time setup (padding / tile selection) — NOT in the per-call path.
    prep = prepare_classifier(weight, bias)

    out = classifier_forward(x, prep)
    out = jax.block_until_ready(out)

    # Reference check against plain JAX (same math as nn.Linear)
    ref = x @ weight.T + bias
    assert out.shape == (B, NUM_CLASSES)
    assert jnp.allclose(out, ref, atol=1e-5, rtol=1e-5)

    print("KERNEL_OK")
</pallas_src>

<mosaic_0001>
module attributes {stable_mosaic.version = 11 : i64} {
  func.func @_linear_kernel_direct(%arg0: i32, %arg1: i32, %arg2: memref<8x32xf32, #tpu.memory_space<vmem>>, %arg3: memref<128x32xf32, #tpu.memory_space<vmem>>, %arg4: memref<1x128xf32, #tpu.memory_space<vmem>>, %arg5: memref<8x128xf32, #tpu.memory_space<vmem>>) attributes {dimension_semantics = [#tpu.dimension_semantics<parallel>, #tpu.dimension_semantics<parallel>], iteration_bounds = array<i64: 1, 1>, scalar_prefetch = 0 : i64, scratch_operands = 0 : i64, tpu.core_type = #tpu.core_type<tc>, window_params = [{transform_indices = @transform_0, window_bounds = array<i64: 8, 32>}, {pipeline_mode = #tpu.pipeline_mode<synchronous>, transform_indices = @transform_1, window_bounds = array<i64: 128, 32>}, {pipeline_mode = #tpu.pipeline_mode<synchronous>, transform_indices = @transform_2, window_bounds = array<i64: 1, 128>}, {transform_indices = @transform_3, window_bounds = array<i64: 8, 128>}]} {
    %c0 = arith.constant 0 : index
    %c0_0 = arith.constant 0 : index
    %0 = vector.load %arg2[%c0, %c0_0] : memref<8x32xf32, #tpu.memory_space<vmem>>, vector<8x32xf32>
    %c0_1 = arith.constant 0 : index
    %c0_2 = arith.constant 0 : index
    %1 = vector.load %arg3[%c0_1, %c0_2] : memref<128x32xf32, #tpu.memory_space<vmem>>, vector<128x32xf32>
    %cst = arith.constant dense<0.000000e+00> : vector<8x128xf32>
    %2 = tpu.matmul %0, %1, %cst {dimension_numbers = #tpu.dot_dimension_numbers<[1], [1], [0], [0], [0, 0, 1, 0], [], []>} : vector<8x32xf32>, vector<128x32xf32>, vector<8x128xf32> -> vector<8x128xf32>
    %c0_3 = arith.constant 0 : index
    %c0_4 = arith.constant 0 : index
    %3 = vector.load %arg4[%c0_3, %c0_4] : memref<1x128xf32, #tpu.memory_space<vmem>>, vector<1x128xf32>
    %4 = vector.broadcast %3 : vector<1x128xf32> to vector<8x128xf32>
    %5 = arith.addf %2, %4 : vector<8x128xf32>
    %c0_5 = arith.constant 0 : index
    %c0_6 = arith.constant 0 : index
    %6 = vector.load %arg5[%c0_5, %c0_6] : memref<8x128xf32, #tpu.memory_space<vmem>>, vector<8x128xf32>
    tpu.vector_store %arg5[%c0_5, %c0_6], %5 {strides = array<i32>} : memref<8x128xf32, #tpu.memory_space<vmem>>, vector<8x128xf32>,
    return
  }
  func.func @transform_0(%arg0: i32, %arg1: i32) -> (i32, i32) {
    %c0_i32 = arith.constant 0 : i32
    %c0_i32_0 = arith.constant 0 : i32
    return %arg0, %c0_i32 : i32, i32
  }
  func.func @transform_1(%arg0: i32, %arg1: i32) -> (i32, i32) {
    %c0_i32 = arith.constant 0 : i32
    %c0_i32_0 = arith.constant 0 : i32
    return %arg1, %c0_i32 : i32, i32
  }
  func.func @transform_2(%arg0: i32, %arg1: i32) -> (i32, i32) {
    %c0_i32 = arith.constant 0 : i32
    %c0_i32_0 = arith.constant 0 : i32
    return %c0_i32, %arg1 : i32, i32
  }
  func.func @transform_3(%arg0: i32, %arg1: i32) -> (i32, i32) {
    %c0_i32 = arith.constant 0 : i32
    return %arg0, %arg1 : i32, i32
  }
}

</mosaic_0001>

<llo_original>
// kernel: tpu_custom_call.1
$region0: #{tpu_custom_call.1}
  #allocation0 [shape = 'u32[]', space=smem, size = 0x4, offset = 0x4, fixed_abs, tag = 'smem constant byte address 0x4 - core index']
  #allocation1 [shape = 'u32[144,128]{1,0:T(1,128)}', space=vmem, size = 0x12000, scoped, tag = 'internal scratch']
  %s0 = inlined_call_operand.vmem [shape: f32[8,32], index: 0, kind: input, shape index: {}]
  %s1 = inlined_call_operand.vmem [shape: f32[128,32], index: 1, kind: input, shape index: {}]
  %s2 = inlined_call_operand.vmem [shape: f32[1,128], index: 2, kind: input, shape index: {}]
  %s3 = inlined_call_operand.hbm [shape: f32[8,128], index: 3, kind: output, shape index: {}]
  %s4 = sld [smem:[#allocation0]]
  $region22: #{tpu_custom_call.1} parent=0
    _
  %s6 = ssub.s32 1, %s4
  %s7 = scalar_select 0, %s6, %s4
  $region1: #{tpu_custom_call.1} parent=0
    #allocation2 [shape = 'u8[4096]{0}', space=vmem, size = 0x1000, scoped, tag = 'output window, operand 0, single buffered']
    #allocation3 [shape = 's32[1]{0}', space=sflag, size = 0x4, scoped, tag = 'scoped memory for tpu_custom_call.1']
    %8 = vsyncpa [#allocation3], 0
    // Predicated region
    $region2: #{tpu_custom_call.1} parent=1 // pred_check
      _
    $region3: #{tpu_custom_call.1} parent=1 // pred_check_branch
      %10 = sbr.rel (0) target = $region5
    $region4: #{tpu_custom_call.1} parent=1 // pred_region
      _
    $region5: #{tpu_custom_call.1} parent=1 // pred_fallthru
      _
    // Predicated region
    $region6: #{tpu_custom_call.1} parent=1 // pred_check
      _
    $region7: #{tpu_custom_call.1} parent=1 // pred_check_branch
      %12 = sbr.rel (0) target = $region9
    $region8: #{tpu_custom_call.1} parent=1 // pred_region
      _
    $region9: #{tpu_custom_call.1} parent=1 // pred_fallthru
      _
    // Predicated region
    $region10: #{tpu_custom_call.1} parent=1 // pred_check
      _
    $region11: #{tpu_custom_call.1} parent=1 // pred_check_branch
      %14 = sbr.rel (0) target = $region13
    $region12: #{tpu_custom_call.1} parent=1 // pred_region
      _
    $region13: #{tpu_custom_call.1} parent=1 // pred_fallthru
      _
    %v15 = vld [vmem:[%s0] sm:$0xff]
    %v16 = vld [vmem:[%s1] sm:$0xff]
    %v17 = vld [vmem:[%s1 + $0x8] sm:$0xff]
    %v18 = vld [vmem:[%s1 + $0x10] sm:$0xff]
    %v19 = vld [vmem:[%s1 + $0x18] sm:$0xff]
    %v20 = vld [vmem:[%s1 + $0x20] sm:$0xff]
    %v21 = vld [vmem:[%s1 + $0x28] sm:$0xff]
    %v22 = vld [vmem:[%s1 + $0x30] sm:$0xff]
    %v23 = vld [vmem:[%s1 + $0x38] sm:$0xff]
    %v24 = vld [vmem:[%s1 + $0x40] sm:$0xff]
    %v25 = vld [vmem:[%s1 + $0x48] sm:$0xff]
    %v26 = vld [vmem:[%s1 + $0x50] sm:$0xff]
    %v27 = vld [vmem:[%s1 + $0x58] sm:$0xff]
    %v28 = vld [vmem:[%s1 + $0x60] sm:$0xff]
    %v29 = vld [vmem:[%s1 + $0x68] sm:$0xff]
    %v30 = vld [vmem:[%s1 + $0x70] sm:$0xff]
    %v31 = vld [vmem:[%s1 + $0x78] sm:$0xff]
    %v32 = vld [vmem:[%s2] sm:$0x1]
    %v34 = vlaneseq
    %v35 = vshrl.u32 %v34, 7
    %v36 = vsub.s32 0, %v35
    %v37 = vrot.slane %v32, %v36
    %vm39 = vcmask 261120
    %v41 = vsel %vm39, %v15, 0
    %v44 = vsel %vm39, %v16, 0
    %v47 = vsel %vm39, %v17, 0
    %v50 = vsel %vm39, %v18, 0
    %v53 = vsel %vm39, %v19, 0
    %v56 = vsel %vm39, %v20, 0
    %v59 = vsel %vm39, %v21, 0
    %v62 = vsel %vm39, %v22, 0
    %v65 = vsel %vm39, %v23, 0
    %v68 = vsel %vm39, %v24, 0
    %v71 = vsel %vm39, %v25, 0
    %v74 = vsel %vm39, %v26, 0
    %v77 = vsel %vm39, %v27, 0
    %v80 = vsel %vm39, %v28, 0
    %v83 = vsel %vm39, %v29, 0
    %v86 = vsel %vm39, %v30, 0
    %v89 = vsel %vm39, %v31, 0
    %91 = vmatprep.subr.mxu0 0.0
    %92 = vmatpush1.xpose.msra.mxu0 %v44
    %93 = vmatprep.subr.mxu0 0.0
    %94 = vmatpush1.xpose.msra.mxu0 %v47
    %95 = vmatprep.subr.mxu0 0.0
    %96 = vmatpush1.xpose.msra.mxu0 %v50
    %97 = vmatprep.subr.mxu0 0.0
    %98 = vmatpush1.xpose.msra.mxu0 %v53
    %99 = vmatprep.subr.mxu0 0.0
    %100 = vmatpush1.xpose.msra.mxu0 %v56
    %101 = vmatprep.subr.mxu0 0.0
    %102 = vmatpush1.xpose.msra.mxu0 %v59
    %103 = vmatprep.subr.mxu0 0.0
    %104 = vmatpush1.xpose.msra.mxu0 %v62
    %105 = vmatprep.subr.mxu0 0.0
    %106 = vmatpush1.xpose.msra.mxu0 %v65
    %107 = vmatprep.subr.mxu0 0.0
    %108 = vmatpush1.xpose.msra.mxu0 %v68
    %109 = vmatprep.subr.mxu0 0.0
    %110 = vmatpush1.xpose.msra.mxu0 %v71
    %111 = vmatprep.subr.mxu0 0.0
    %112 = vmatpush1.xpose.msra.mxu0 %v74
    %113 = vmatprep.subr.mxu0 0.0
    %114 = vmatpush1.xpose.msra.mxu0 %v77
    %115 = vmatprep.subr.mxu0 0.0
    %116 = vmatpush1.xpose.msra.mxu0 %v80
    %117 = vmatprep.subr.mxu0 0.0
    %118 = vmatpush1.xpose.msra.mxu0 %v83
    %119 = vmatprep.subr.mxu0 0.0
    %120 = vmatpush1.xpose.msra.mxu0 %v86
    %121 = vmatprep.subr.mxu0 0.0
    %122 = vmatpush1.xpose.msra.mxu0 %v89
    %123 = vmatprep.subr.mxu0 0.0
    %124 = vmatpush1.xpose.msra.mxu0 0.0
    %125 = vmatprep.subr.mxu0 0.0
    %126 = vmatpush1.xpose.msra.mxu0 0.0
    %127 = vmatprep.subr.mxu0 0.0
    %128 = vmatpush1.xpose.msra.mxu0 0.0
    %129 = vmatprep.subr.mxu0 0.0
    %130 = vmatpush1.xpose.msra.mxu0 0.0
    %131 = vmatprep.subr.mxu0 0.0
    %132 = vmatpush1.xpose.msra.mxu0 0.0
    %133 = vmatprep.subr.mxu0 0.0
    %134 = vmatpush1.xpose.msra.mxu0 0.0
    %135 = vmatprep.subr.mxu0 0.0
    %136 = vmatpush1.xpose.msra.mxu0 0.0
    %137 = vmatprep.subr.mxu0 0.0
    %138 = vmatpush1.xpose.msra.mxu0 0.0
    %139 = vmatprep.subr.mxu0 0.0
    %140 = vmatpush1.xpose.msra.mxu0 0.0
    %141 = vmatprep.subr.mxu0 0.0
    %142 = vmatpush1.xpose.msra.mxu0 0.0
    %143 = vmatprep.subr.mxu0 0.0
    %144 = vmatpush1.xpose.msra.mxu0 0.0
    %145 = vmatprep.subr.mxu0 0.0
    %146 = vmatpush1.xpose.msra.mxu0 0.0
    %147 = vmatprep.subr.mxu0 0.0
    %148 = vmatpush1.xpose.msra.mxu0 0.0
    %149 = vmatprep.subr.mxu0 0.0
    %150 = vmatpush1.xpose.msra.mxu0 0.0
    %151 = vmatprep.subr.mxu0 0.0
    %152 = vmatpush1.xpose.msra.mxu0 0.0
    %153 = vmatprep.subr.mxu0 0.0
    %154 = vmatpush1.xpose.msra.mxu0 0.0
    %155 = vmatprep.mubr.f32.mxu0 0.0
    %156 = vmatmul.mubr.f32.gmra.mrb[0].mxu0 %v41
    %v157 = vpop.f32.mrb[0].mxu0
    %v158 = vadd.f32 %v37, %v157
    %v159 = vpop.f32.mrb[0].mxu0
    %160 = vdwg.mxu0
    %161 = vst [vmem:[#allocation2] sm:$0xff] %v158
    // Predicated region
    $region14: #{tpu_custom_call.1} parent=1 // pred_check
      _
    $region15: #{tpu_custom_call.1} parent=1 // pred_check_branch
      %163 = sbr.rel (0) target = $region17
    $region16: #{tpu_custom_call.1} parent=1 // pred_region
      %s165 = ssub.s32 128, 128
      %166 = vsyncadd [#allocation3], %s165
      %s168 = sshll.u32 [#allocation2], 4
      %s169 = int_to_ptr.vmem [resolvable:$true] %s168
      %171 = dma.vmem_to_hbm [thread:$0]  %s169, 128, %s3, [#allocation3]
    $region17: #{tpu_custom_call.1} parent=1 // pred_fallthru
      _
    // Predicated region
    $region18: #{tpu_custom_call.1} parent=1 // pred_check
      _
    $region19: #{tpu_custom_call.1} parent=1 // pred_check_branch
      %173 = sbr.rel (0) target = $region21
    $region20: #{tpu_custom_call.1} parent=1 // pred_region
      %174 = dma.done [#allocation3], 128
    $region21: #{tpu_custom_call.1} parent=1 // pred_fallthru
      _
    %175 = vsyncpa [#allocation3], 1

</llo_original>
